<compile_context>
chip_gen: v5e
topology: v5e:2x2
jax: 0.10.0
libtpu: 0.0.40
codegen_flags: <defaults>
</compile_context>

<pallas_src>
import jax
import jax.numpy as jnp
from jax import lax
from jax.experimental import pallas as pl
from jax.experimental.pallas import tpu as pltpu


def _generator_kernel(x_ref, w_ref, b_ref, o_ref):
    # x_ref: (1, TC, K)  one batch's channel tile, seg_num*seg_len flattened
    # w_ref: (P, K)      fused weight  Wf[p, s*L + l] = wo[s] * wp[p, l]
    # b_ref: (P, 1)      fused bias    bf[p] = sum(wo) * bp[p] + bo
    # o_ref: (1, P, TC)  output tile of [B, pred_len, C]
    x = x_ref[0]            # (TC, K)
    w = w_ref[...]          # (P, K)
    # (P, K) . (TC, K) contracting on K -> (P, TC): single MXU GEMM per step.
    out = lax.dot_general(w, x, (((1,), (1,)), ((), ())),
                          preferred_element_type=jnp.float32)
    o_ref[0] = (out + b_ref[...]).astype(o_ref.dtype)


def generator_forward(x, w_proj, b_proj, w_out, b_out):
    """x: [B, C, seg_num, seg_len] -> [B, pred_len, C]"""
    B, C, S, L = x.shape
    P = w_proj.shape[0]          # pred_len (PyTorch weight is [P, L])
    K = S * L

    # Lane-dense view of x (free row-major reshape): [B, C, S*L].
    x3 = x.reshape(B, C, K)

    # Fold both Linears into one weight / bias (done once, tiny arrays).
    wo = w_out.reshape(S)                                            # (S,)
    w_fused = jnp.einsum("s,pl->psl", wo, w_proj).reshape(P, K).astype(x.dtype)
    b_fused = (jnp.sum(wo) * b_proj + b_out[0]).reshape(P, 1).astype(jnp.float32)

    # Tile the channel axis (the lane axis of the output). Whole C per step
    # unless C is very large; the cap keeps double-buffered x tiles well inside
    # VMEM (including v7x's 64 MiB).
    TC_CAP = 1024                      # multiple of both 8 and 128
    TC = C if C <= TC_CAP else TC_CAP
    grid = (B, pl.cdiv(C, TC))

    out = pl.pallas_call(
        _generator_kernel,
        out_shape=jax.ShapeDtypeStruct((B, P, C), x.dtype),
        grid_spec=pltpu.PrefetchScalarGridSpec(
            num_scalar_prefetch=0,
            grid=grid,
            in_specs=[
                pl.BlockSpec((1, TC, K), lambda b, j: (b, j, 0)),
                pl.BlockSpec((P, K), lambda b, j: (0, 0)),   # resident weight
                pl.BlockSpec((P, 1), lambda b, j: (0, 0)),   # resident bias
            ],
            out_specs=pl.BlockSpec((1, P, TC), lambda b, j: (b, 0, j)),
        ),
        compiler_params=pltpu.CompilerParams(
            dimension_semantics=("parallel", "parallel")),
    )(x3, w_fused, b_fused)
    return out


def reference_forward(x, w_proj, b_proj, w_out, b_out):
    """Pure-JAX reference matching the PyTorch module."""
    proj = jnp.einsum("bcsl,pl->bcsp", x, w_proj) + b_proj          # (B,C,S,P)
    y = jnp.einsum("bcsp,os->bcpo", proj, w_out) + b_out            # (B,C,P,1)
    y = y[..., 0]                                                   # (B,C,P)
    return jnp.swapaxes(y, -1, -2)                                  # (B,P,C)


if __name__ == "__main__":
    # Small shapes consistent with the module's forward.
    B, C = 2, 4          # batch, channels
    seg_num, seg_len = 8, 16
    pred_len = 32

    key = jax.random.PRNGKey(0)
    kx, kwp, kbp, kwo, kbo = jax.random.split(key, 5)

    x = jax.random.normal(kx, (B, C, seg_num, seg_len), dtype=jnp.float32)
    # nn.Linear(seg_len, pred_len): weight [pred_len, seg_len], bias [pred_len]
    w_proj = jax.random.normal(kwp, (pred_len, seg_len), dtype=jnp.float32) * 0.1
    b_proj = jax.random.normal(kbp, (pred_len,), dtype=jnp.float32) * 0.1
    # nn.Linear(seg_num, 1): weight [1, seg_num], bias [1]
    w_out = jax.random.normal(kwo, (1, seg_num), dtype=jnp.float32) * 0.1
    b_out = jax.random.normal(kbo, (1,), dtype=jnp.float32) * 0.1

    out = generator_forward(x, w_proj, b_proj, w_out, b_out)
    out = jax.block_until_ready(out)

    ref = reference_forward(x, w_proj, b_proj, w_out, b_out)
    assert out.shape == (B, pred_len, C), out.shape
    assert jnp.allclose(out, ref, atol=1e-4, rtol=1e-4), float(jnp.max(jnp.abs(out - ref)))

    # TODO(synk): Dropout layers are inference-mode identity; training-mode RNG
    # dropout could be added with pltpu.prng_seed/prng_random_bits if needed.
    print("KERNEL_OK")
</pallas_src>

<mosaic_0001>
module attributes {stable_mosaic.version = 11 : i64} {
  func.func @_generator_kernel(%arg0: i32, %arg1: i32, %arg2: memref<1x4x128xf32, #tpu.memory_space<vmem>>, %arg3: memref<32x128xf32, #tpu.memory_space<vmem>>, %arg4: memref<32x1xf32, #tpu.memory_space<vmem>>, %arg5: memref<1x32x4xf32, #tpu.memory_space<vmem>>) attributes {dimension_semantics = [#tpu.dimension_semantics<parallel>, #tpu.dimension_semantics<parallel>], iteration_bounds = array<i64: 2, 1>, scalar_prefetch = 0 : i64, scratch_operands = 0 : i64, tpu.core_type = #tpu.core_type<tc>, window_params = [{transform_indices = @transform_0, window_bounds = array<i64: 1, 4, 128>}, {pipeline_mode = #tpu.pipeline_mode<synchronous>, transform_indices = @transform_1, window_bounds = array<i64: 32, 128>}, {pipeline_mode = #tpu.pipeline_mode<synchronous>, transform_indices = @transform_2, window_bounds = array<i64: 32, 1>}, {transform_indices = @transform_3, window_bounds = array<i64: 1, 32, 4>}]} {
    %c0 = arith.constant 0 : index
    %c0_0 = arith.constant 0 : index
    %c0_1 = arith.constant 0 : index
    %0 = vector.load %arg2[%c0, %c0_0, %c0_1] : memref<1x4x128xf32, #tpu.memory_space<vmem>>, vector<1x4x128xf32>
    %1 = vector.shape_cast %0 : vector<1x4x128xf32> to vector<4x128xf32>
    %c0_2 = arith.constant 0 : index
    %c0_3 = arith.constant 0 : index
    %2 = vector.load %arg3[%c0_2, %c0_3] : memref<32x128xf32, #tpu.memory_space<vmem>>, vector<32x128xf32>
    %cst = arith.constant dense<0.000000e+00> : vector<32x4xf32>
    %3 = tpu.matmul %2, %1, %cst {dimension_numbers = #tpu.dot_dimension_numbers<[1], [1], [0], [0], [0, 0, 1, 0], [], []>} : vector<32x128xf32>, vector<4x128xf32>, vector<32x4xf32> -> vector<32x4xf32>
    %c0_4 = arith.constant 0 : index
    %c0_5 = arith.constant 0 : index
    %4 = vector.load %arg4[%c0_4, %c0_5] : memref<32x1xf32, #tpu.memory_space<vmem>>, vector<32x1xf32>
    %5 = vector.broadcast %4 : vector<32x1xf32> to vector<32x4xf32>
    %6 = arith.addf %3, %5 : vector<32x4xf32>
    %c0_6 = arith.constant 0 : index
    %c0_7 = arith.constant 0 : index
    %c0_8 = arith.constant 0 : index
    %7 = vector.load %arg5[%c0_6, %c0_7, %c0_8] : memref<1x32x4xf32, #tpu.memory_space<vmem>>, vector<1x32x4xf32>
    %8 = vector.shape_cast %7 : vector<1x32x4xf32> to vector<32x4xf32>
    %9 = vector.shape_cast %6 : vector<32x4xf32> to vector<1x32x4xf32>
    tpu.vector_store %arg5[%c0_6, %c0_7, %c0_8], %9 {strides = array<i32>} : memref<1x32x4xf32, #tpu.memory_space<vmem>>, vector<1x32x4xf32>,
    return
  }
  func.func @transform_0(%arg0: i32, %arg1: i32) -> (i32, i32, i32) {
    %c0_i32 = arith.constant 0 : i32
    %c0_i32_0 = arith.constant 0 : i32
    return %arg0, %arg1, %c0_i32 : i32, i32, i32
  }
  func.func @transform_1(%arg0: i32, %arg1: i32) -> (i32, i32) {
    %c0_i32 = arith.constant 0 : i32
    %c0_i32_0 = arith.constant 0 : i32
    %c0_i32_1 = arith.constant 0 : i32
    return %c0_i32, %c0_i32_0 : i32, i32
  }
  func.func @transform_2(%arg0: i32, %arg1: i32) -> (i32, i32) {
    %c0_i32 = arith.constant 0 : i32
    %c0_i32_0 = arith.constant 0 : i32
    %c0_i32_1 = arith.constant 0 : i32
    return %c0_i32, %c0_i32_0 : i32, i32
  }
  func.func @transform_3(%arg0: i32, %arg1: i32) -> (i32, i32, i32) {
    %c0_i32 = arith.constant 0 : i32
    %c0_i32_0 = arith.constant 0 : i32
    return %arg0, %c0_i32, %arg1 : i32, i32, i32
  }
}

</mosaic_0001>

<llo_original>
// kernel: tpu_custom_call.1
$region0: #{tpu_custom_call.1}
  #allocation0 [shape = 'u32[]', space=smem, size = 0x4, offset = 0x4, fixed_abs, tag = 'smem constant byte address 0x4 - core index']
  #allocation1 [shape = 'u32[72,128]{1,0:T(1,128)}', space=vmem, size = 0x9000, scoped, tag = 'internal scratch']
  %s0 = inlined_call_operand.hbm [shape: f32[2,4,128], index: 0, kind: input, shape index: {}]
  %s1 = inlined_call_operand.vmem [shape: f32[32,128], index: 1, kind: input, shape index: {}]
  %s2 = inlined_call_operand.vmem [shape: f32[32,1], index: 2, kind: input, shape index: {}]
  %s3 = inlined_call_operand.vmem [shape: f32[2,32,4], index: 3, kind: output, shape index: {}]
  %s4 = sld [smem:[#allocation0]]
  $region49: #{tpu_custom_call.1} parent=0
    _
  %s6 = ssub.s32 1, %s4
  %s7 = scalar_select 0, %s6, %s4
  $region1: #{tpu_custom_call.1} parent=0
    #allocation2 [shape = 'u8[4096]{0}', space=vmem, size = 0x1000, scoped, tag = 'input window, operand 0']
    #allocation3 [shape = 's32[2]{0}', space=sflag, size = 0x8, scoped, tag = 'scoped memory for tpu_custom_call.1']
    %8 = vsyncpa [#allocation3], 0
    %s9 = scalar_lea.sflag [#allocation3], 1
    %10 = vsyncpa %s9, 0
    loop: start=0, step=1, limit=4
    $region2: #{tpu_custom_call.1} parent=1 // loop_pre_header
      _
    $region3: #{tpu_custom_call.1} parent=1 // loop_header
      %s12 = sphi 0, %s16
      %p13 = scmp.ge.s32.totalorder %s12, 4
      %s19 = sphi 0, %s31
      %s20 = sphi 0, %s27
      %s21 = sphi 0, %s19
      %s22 = sphi 0, %s20
      %s23 = sphi 0, %s21
      %s24 = sphi 0, %s22
      %s36 = sphi 0, %s38
      %s39 = sphi 0, %s36
      %s40 = sphi 0, %s39
      %s56 = sphi 0, %s40
      %s60 = sphi 0, %s60
      %s62 = sphi 0, %s60
      %s63 = sphi 0, %s62
      %s77 = sphi 0, %s63
      %s81 = sphi 0, %s81
      %s83 = sphi 0, %s81
      %s84 = sphi 0, %s83
      %s98 = sphi 0, %s84
      %s106 = sphi 0, %s108
      %s109 = sphi 0, %s106
      %s110 = sphi 0, %s109
      %s126 = sphi 0, %s110
    $region4: #{tpu_custom_call.1} parent=1 // loop_header_branch
      %15 = sbr.rel (%p13) target = $region8
    $region5: #{tpu_custom_call.1} parent=1 // loop_body
      %s17 = ssub.s32 %s12, 1
      %s18 = ssub.s32 %s12, 2
      %s25 = sadd.s32 1, %s20
      %p26 = scmp.ge.s32.totalorder %s25, 1
      %s27 = scalar_select %p26, 0, %s25
      %s28 = sadd.s32 1, %s19
      %s29 = scalar_select %p26, %s28, %s19
      %p30 = scmp.ge.s32.totalorder %s29, 2
      %s31 = scalar_select %p30, 0, %s29
      %s32 = ssub.s32 %s19, %s31
      %s33 = ssub.s32 %s20, %s27
      %s34 = sor.u32 %s32, %s33
      %p35 = scmp.eq.s32.totalorder %s34, 0
      %s37 = sadd.s32 %s36, 1
      %s38 = scalar_select %p35, %s36, %s37
      %p41 = pneg %p35
      %p42 = scmp.eq.s32.totalorder %s12, 1
      %p43 = por %p41, %p42
      %p44 = scmp.ne.s32.totalorder %s36, %s39
      %p45 = scmp.eq.s32.totalorder %s12, 0
      %p46 = por %p44, %p45
      %p47 = scmp.ne.s32.totalorder %s36, %s39
      %p48 = scmp.eq.s32.totalorder %s17, 1
      %p49 = por %p47, %p48
      %p50 = scmp.ne.s32.totalorder %s39, %s40
      %p51 = scmp.eq.s32.totalorder %s17, 0
      %p52 = por %p50, %p51
      %p53 = scmp.ne.s32.totalorder %s39, %s40
      %p54 = scmp.eq.s32.totalorder %s18, 1
      %p55 = por %p53, %p54
      %p57 = scmp.ne.s32.totalorder %s40, %s56
      %p58 = scmp.eq.s32.totalorder %s18, 0
      %p59 = por %p57, %p58
      %s61 = sadd.s32 %s60, 1
      %p64 = scmp.eq.s32.totalorder %s12, 1
      %p65 = scmp.ne.s32.totalorder %s60, %s62
      %p66 = scmp.eq.s32.totalorder %s12, 0
      %p67 = por %p65, %p66
      %p68 = scmp.ne.s32.totalorder %s60, %s62
      %p69 = scmp.eq.s32.totalorder %s17, 1
      %p70 = por %p68, %p69
      %p71 = scmp.ne.s32.totalorder %s62, %s63
      %p72 = scmp.eq.s32.totalorder %s17, 0
      %p73 = por %p71, %p72
      %p74 = scmp.ne.s32.totalorder %s62, %s63
      %p75 = scmp.eq.s32.totalorder %s18, 1
      %p76 = por %p74, %p75
      %p78 = scmp.ne.s32.totalorder %s63, %s77
      %p79 = scmp.eq.s32.totalorder %s18, 0
      %p80 = por %p78, %p79
      %s82 = sadd.s32 %s81, 1
      %p85 = scmp.eq.s32.totalorder %s12, 1
      %p86 = scmp.ne.s32.totalorder %s81, %s83
      %p87 = scmp.eq.s32.totalorder %s12, 0
      %p88 = por %p86, %p87
      %p89 = scmp.ne.s32.totalorder %s81, %s83
      %p90 = scmp.eq.s32.totalorder %s17, 1
      %p91 = por %p89, %p90
      %p92 = scmp.ne.s32.totalorder %s83, %s84
      %p93 = scmp.eq.s32.totalorder %s17, 0
      %p94 = por %p92, %p93
      %p95 = scmp.ne.s32.totalorder %s83, %s84
      %p96 = scmp.eq.s32.totalorder %s18, 1
      %p97 = por %p95, %p96
      %p99 = scmp.ne.s32.totalorder %s84, %s98
      %p100 = scmp.eq.s32.totalorder %s18, 0
      %p101 = por %p99, %p100
      %s102 = ssub.s32 %s19, %s31
      %s103 = ssub.s32 %s20, %s27
      %s104 = sor.u32 %s102, %s103
      %p105 = scmp.eq.s32.totalorder %s104, 0
      %s107 = sadd.s32 %s106, 1
      %s108 = scalar_select %p105, %s106, %s107
      %p111 = pneg %p105
      %p112 = scmp.eq.s32.totalorder %s12, 1
      %p113 = por %p111, %p112
      %p114 = scmp.ne.s32.totalorder %s106, %s109
      %p115 = scmp.eq.s32.totalorder %s12, 0
      %p116 = por %p114, %p115
      %p117 = scmp.ne.s32.totalorder %s106, %s109
      %p118 = scmp.eq.s32.totalorder %s17, 1
      %p119 = por %p117, %p118
      %p120 = scmp.ne.s32.totalorder %s109, %s110
      %p121 = scmp.eq.s32.totalorder %s17, 0
      %p122 = por %p120, %p121
      %p123 = scmp.ne.s32.totalorder %s109, %s110
      %p124 = scmp.eq.s32.totalorder %s18, 1
      %p125 = por %p123, %p124
      %p127 = scmp.ne.s32.totalorder %s110, %s126
      %p128 = scmp.eq.s32.totalorder %s18, 0
      %p129 = por %p127, %p128
      %p130 = scmp.le.s32.totalorder 1, %s12
      %p131 = scmp.lt.s32.totalorder %s12, 3
      %p132 = pnand %p130, %p131
      %p133 = pneg %p132
      // Predicated region
      $region9: #{tpu_custom_call.1} parent=5 // pred_check
        _
      $region10: #{tpu_custom_call.1} parent=5 // pred_check_branch
        %135 = sbr.rel (%p132) target = $region12
      $region11: #{tpu_custom_call.1} parent=5 // pred_region
        %s136 = ssub.s32 %s12, 1
        // Predicated region
        $region13: #{tpu_custom_call.1} parent=11 // pred_check
          %p137 = pneg %p73
        $region14: #{tpu_custom_call.1} parent=11 // pred_check_branch
          %139 = sbr.rel (%p137) target = $region16
        $region15: #{tpu_custom_call.1} parent=11 // pred_region
          _
        $region16: #{tpu_custom_call.1} parent=11 // pred_fallthru
          _
        // Predicated region
        $region17: #{tpu_custom_call.1} parent=11 // pred_check
          %p140 = pneg %p94
        $region18: #{tpu_custom_call.1} parent=11 // pred_check_branch
          %142 = sbr.rel (%p140) target = $region20
        $region19: #{tpu_custom_call.1} parent=11 // pred_region
          _
        $region20: #{tpu_custom_call.1} parent=11 // pred_fallthru
          _
      $region12: #{tpu_custom_call.1} parent=5 // pred_fallthru
        _
      %p143 = scmp.lt.s32.totalorder %s12, 2
      // Predicated region
      $region21: #{tpu_custom_call.1} parent=5 // pred_check
        %p144 = pneg %p143
      $region22: #{tpu_custom_call.1} parent=5 // pred_check_branch
        %146 = sbr.rel (%p144) target = $region24
      $region23: #{tpu_custom_call.1} parent=5 // pred_region
        // Predicated region
        $region25: #{tpu_custom_call.1} parent=23 // pred_check
          %p147 = pneg %p46
        $region26: #{tpu_custom_call.1} parent=23 // pred_check_branch
          %149 = sbr.rel (%p147) target = $region28
        $region27: #{tpu_custom_call.1} parent=23 // pred_region
          %s150 = sand.u32 %s36, 1
          %s151 = scalar_lea.sflag [#allocation3], %s150
          %s152 = sand.u32 %s36, 1
          %s153 = smul.addr %s152, 4
          %s154 = scalar_lea.vmem [#allocation2], %s153
          %156 = vsyncadd %s151, 0
          %s157 = sadd.s32 %s20, %s19
          %s158 = smul.addr %s157, 4
          %s159 = scalar_lea.hbm %s0, %s158
          %s161 = sshll.u32 %s159, 4
          %s162 = int_to_ptr.hbm [resolvable:$true] %s161
          %s163 = sshll.u32 %s154, 4
          %s164 = int_to_ptr.vmem [resolvable:$true] %s163
          %166 = dma.hbm_to_vmem [thread:$0]  %s162, 64, %s164, %s151
        $region28: #{tpu_custom_call.1} parent=23 // pred_fallthru
          _
      $region24: #{tpu_custom_call.1} parent=5 // pred_fallthru
        _
      %p167 = scmp.le.s32.totalorder 1, %s12
      %p168 = scmp.lt.s32.totalorder %s12, 3
      %p169 = pnand %p167, %p168
      %p170 = pneg %p169
      // Predicated region
      $region29: #{tpu_custom_call.1} parent=5 // pred_check
        _
      $region30: #{tpu_custom_call.1} parent=5 // pred_check_branch
        %172 = sbr.rel (%p169) target = $region32
      $region31: #{tpu_custom_call.1} parent=5 // pred_region
        %s173 = ssub.s32 %s12, 1
        %s174 = sand.u32 %s39, 1
        %s175 = scalar_lea.sflag [#allocation3], %s174
        %s176 = sand.u32 %s39, 1
        %s177 = smul.addr %s176, 4
        %s178 = scalar_lea.vmem [#allocation2], %s177
        // Predicated region
        $region33: #{tpu_custom_call.1} parent=31 // pred_check
          %p179 = pneg %p52
        $region34: #{tpu_custom_call.1} parent=31 // pred_check_branch
          %181 = sbr.rel (%p179) target = $region36
        $region35: #{tpu_custom_call.1} parent=31 // pred_region
          %183 = dma.done %s175, 64
        $region36: #{tpu_custom_call.1} parent=31 // pred_fallthru
          _
        %s184 = sand.u32 %s39, 1
        %s185 = scalar_lea.sflag [#allocation3], %s184
        %s186 = sand.u32 %s39, 1
        %s187 = smul.addr %s186, 4
        %s188 = scalar_lea.vmem [#allocation2], %s187
        %p189 = pneg %p52
        %p190 = pneg %p49
        %p191 = pneg %p73
        %p192 = pneg %p70
        %p193 = pneg %p94
        %p194 = pneg %p91
        %p195 = pneg %p122
        %p196 = pneg %p119
        %p197 = scmp.lt.s32.totalorder %s21, 1
        %s198 = scalar_select %p197, %s21, 1
        %p199 = scmp.lt.s32.totalorder %s22, 0
        %s200 = scalar_select %p199, %s22, 0
        %s201 = smul.addr %s198, 4
        %s202 = sadd.s32 %s200, %s201
        %s203 = smul.addr %s202, 8
        %s204 = scalar_lea.vmem %s3, %s203
        %p205 = scmp.lt.s32.totalorder %s21, 1
        %s206 = scalar_select %p205, %s21, 1
        %p207 = scmp.lt.s32.totalorder %s22, 0
        %s208 = scalar_select %p207, %s22, 0
        %s209 = smul.addr %s206, 4
        %s210 = sadd.s32 %s208, %s209
        %s211 = smul.addr %s210, 8
        %s212 = scalar_lea.vmem %s3, %s211
        %v213 = vld [vmem:[%s178] sm:$0xf]
        %v214 = vld [vmem:[%s1] sm:$0xff]
        %v215 = vld [vmem:[%s1 + $0x8] sm:$0xff]
        %v216 = vld [vmem:[%s1 + $0x10] sm:$0xff]
        %v217 = vld [vmem:[%s1 + $0x18] sm:$0xff]
        %v218 = vld [vmem:[%s2] sm:$0xff]
        %v219 = vld [vmem:[%s2 + $0x8] sm:$0xff]
        %v220 = vld [vmem:[%s2 + $0x10] sm:$0xff]
        %v221 = vld [vmem:[%s2 + $0x18] sm:$0xff]
        %223 = vset.pattern.permute.xlu0 0
        %224 = vperm.xlu0 %223, %v218
        %v225 = vpop.permute.xlu0 %224
        %228 = vset.pattern.permute.xlu0 0
        %229 = vperm.xlu0 %228, %v219
        %v230 = vpop.permute.xlu0 %229
        %233 = vset.pattern.permute.xlu0 0
        %234 = vperm.xlu0 %233, %v220
        %v235 = vpop.permute.xlu0 %234
        %238 = vset.pattern.permute.xlu0 0
        %239 = vperm.xlu0 %238, %v221
        %v240 = vpop.permute.xlu0 %239
        %242 = vmatpush.xpose.msra.mxu0 0.0
        %243 = vmatpush.xpose.msra.mxu0 0.0
        %244 = vmatpush.xpose.msra.mxu0 0.0
        %245 = vmatpush.xpose.msra.mxu0 0.0
        %246 = vmatpush.xpose.msra.mxu0 0.0
        %247 = vmatpush.xpose.msra.mxu0 0.0
        %248 = vmatpush.xpose.msra.mxu0 0.0
        %249 = vmatpush.xpose.msra.mxu0 0.0
        %250 = vmatpush.xpose.msra.mxu0 0.0
        %251 = vmatpush.xpose.msra.mxu0 0.0
        %252 = vmatpush.xpose.msra.mxu0 0.0
        %253 = vmatpush.xpose.msra.mxu0 0.0
        %254 = vmatpush.xpose.msra.mxu0 0.0
        %255 = vmatpush.xpose.msra.mxu0 0.0
        %256 = vmatpush.xpose.msra.mxu0 0.0
        %257 = vmatpush.xpose.msra.mxu0 %v213
        %258 = vmatmul.f32.gmra.mxu0 %v214
        %v259 = vpop.f32.mrf.mxu0
        %v260 = vadd.f32 %v225, %v259
        %261 = vmatmul.f32.gmra.mxu0 %v215
        %v262 = vpop.f32.mrf.mxu0
        %v263 = vadd.f32 %v230, %v262
        %264 = vmatmul.f32.gmra.mxu0 %v216
        %v265 = vpop.f32.mrf.mxu0
        %v266 = vadd.f32 %v235, %v265
        %267 = vmatmul.f32.gmra.mxu0 %v217
        %v268 = vpop.f32.mrf.mxu0
        %v269 = vadd.f32 %v240, %v268
        %270 = vdwg.mxu0
        %vm271 = vcmask 31744
        %272 = vst.msk [vmem:[%s212] sm:$0xff] %vm271, %v260
        %273 = vst.msk [vmem:[%s212 + $0x8] sm:$0xff] %vm271, %v263
        %274 = vst.msk [vmem:[%s212 + $0x10] sm:$0xff] %vm271, %v266
        %275 = vst.msk [vmem:[%s212 + $0x18] sm:$0xff] %vm271, %v269
        %p276 = scmp.lt.s32.totalorder %s21, 1
        %s277 = scalar_select %p276, %s21, 1
        %p278 = scmp.lt.s32.totalorder %s22, 0
        %s279 = scalar_select %p278, %s22, 0
        %s280 = smul.addr %s277, 4
        %s281 = sadd.s32 %s279, %s280
        %s282 = smul.addr %s281, 8
        %s283 = scalar_lea.vmem %s3, %s282
        // Predicated region
        $region37: #{tpu_custom_call.1} parent=31 // pred_check
          %p284 = pneg %p119
        $region38: #{tpu_custom_call.1} parent=31 // pred_check_branch
          %286 = sbr.rel (%p284) target = $region40
        $region39: #{tpu_custom_call.1} parent=31 // pred_region
          _
        $region40: #{tpu_custom_call.1} parent=31 // pred_fallthru
          _
      $region32: #{tpu_custom_call.1} parent=5 // pred_fallthru
        _
      %p287 = scmp.le.s32.totalorder 2, %s12
      // Predicated region
      $region41: #{tpu_custom_call.1} parent=5 // pred_check
        %p288 = pneg %p287
      $region42: #{tpu_custom_call.1} parent=5 // pred_check_branch
        %290 = sbr.rel (%p288) target = $region44
      $region43: #{tpu_custom_call.1} parent=5 // pred_region
        %s291 = ssub.s32 %s12, 2
        // Predicated region
        $region45: #{tpu_custom_call.1} parent=43 // pred_check
          %p292 = pneg %p125
        $region46: #{tpu_custom_call.1} parent=43 // pred_check_branch
          %294 = sbr.rel (%p292) target = $region48
        $region47: #{tpu_custom_call.1} parent=43 // pred_region
          %p295 = scmp.lt.s32.totalorder %s23, 1
          %s296 = scalar_select %p295, %s23, 1
          %p297 = scmp.lt.s32.totalorder %s24, 0
          %s298 = scalar_select %p297, %s24, 0
          %s299 = smul.addr %s296, 4
          %s300 = sadd.s32 %s298, %s299
          %s301 = smul.addr %s300, 8
          %s302 = scalar_lea.vmem %s3, %s301
        $region48: #{tpu_custom_call.1} parent=43 // pred_fallthru
          _
      $region44: #{tpu_custom_call.1} parent=5 // pred_fallthru
        _
    $region6: #{tpu_custom_call.1} parent=1 // loop_footer
      %s16 = sadd.s32 1, %s12
    $region7: #{tpu_custom_call.1} parent=1 // loop_footer_branch
      %11 = sbr.rel target = $region3
    $region8: #{tpu_custom_call.1} parent=1 // loop_exit
      _
    %303 = vsyncpa [#allocation3], 1
    %s304 = scalar_lea.sflag [#allocation3], 1
    %305 = vsyncpa %s304, 1

</llo_original>
